<compile_context>
chip_gen: v5e
topology: v5e:2x2
jax: 0.10.0
libtpu: 0.0.40
codegen_flags: <defaults>
</compile_context>

<pallas_src>
import functools

import jax
import jax.numpy as jnp
from jax.experimental import pallas as pl
from jax.experimental.pallas import tpu as pltpu


def _round_up(x, m):
    return ((x + m - 1) // m) * m


def _user_embedding_kernel(idx_ref, table_ref, out_ref):
    # idx_ref   : (TILE_B, 4) int32, indices already shifted into fused-row space
    # table_ref : (N_pad, 4*D) float32 block-diagonal fused table (VMEM resident)
    # out_ref   : (TILE_B, 4*D) float32
    idx = idx_ref[...]                                   # (TILE_B, 4)
    table = table_ref[...]                               # (N_pad, 4*D)
    tb = idx.shape[0]
    n_pad = table.shape[0]

    # One shared iota, reused for all four feature compares.
    iota = jax.lax.broadcasted_iota(jnp.int32, (tb, n_pad), 1)

    # Combined one-hot: row regions are disjoint for in-range indices, so OR
    # of the four compares is the block-diagonal selector.
    onehot = ((idx[:, 0:1] == iota)
              | (idx[:, 1:2] == iota)
              | (idx[:, 2:3] == iota)
              | (idx[:, 3:4] == iota)).astype(jnp.float32)   # (TILE_B, N_pad)

    # Single MXU matmul -> concatenated embeddings; one lane-dense store.
    out_ref[...] = jnp.dot(onehot, table, preferred_element_type=jnp.float32)


@functools.partial(jax.jit, static_argnames=("tile_b",))
def user_embedding_ml(user_fea, emb_gender, emb_age, emb_occupation, emb_area,
                      *, tile_b=512):
    """user_fea: (B, 4) int; tables: (N_t, D) float32. Returns (B, 4*D) float32."""
    B = user_fea.shape[0]
    D = emb_gender.shape[1]
    tables = (emb_gender, emb_age, emb_occupation, emb_area)
    sizes = [int(t.shape[0]) for t in tables]
    n_total = sum(sizes)
    n_pad = _round_up(n_total, 128)          # zero pad rows; MXU/lane friendly

    # Block-diagonal fused table (static given the weights; XLA hoists this
    # out of the hot path when the weights are constants under jit).
    fused = jnp.zeros((n_pad, 4 * D), jnp.float32)
    offsets = []
    row = 0
    for c, t in enumerate(tables):
        offsets.append(row)
        fused = fused.at[row:row + sizes[c], c * D:(c + 1) * D].set(
            t.astype(jnp.float32))
        row += sizes[c]
    offsets = jnp.asarray(offsets, jnp.int32)            # (4,)

    # Shift per-feature indices into the fused row space (cheap VPU add).
    idx = user_fea.astype(jnp.int32) + offsets[None, :]  # (B, 4)

    # Batch tiling: big lane/sublane-aligned tiles, clamped for tiny batches.
    tb = max(8, min(int(tile_b), _round_up(B, 8)))
    grid = (pl.cdiv(B, tb),)

    return pl.pallas_call(
        _user_embedding_kernel,
        out_shape=jax.ShapeDtypeStruct((B, 4 * D), jnp.float32),
        grid_spec=pltpu.PrefetchScalarGridSpec(
            num_scalar_prefetch=0,
            grid=grid,
            in_specs=[
                # (TILE_B, 4) index tile, pipelined over the batch.
                pl.BlockSpec((tb, 4), lambda i: (i, 0)),
                # Fused table: constant index_map -> fetched once, VMEM resident.
                pl.BlockSpec((n_pad, 4 * D), lambda i: (0, 0)),
            ],
            out_specs=pl.BlockSpec((tb, 4 * D), lambda i: (i, 0)),
        ),
        compiler_params=pltpu.CompilerParams(
            dimension_semantics=("parallel",)),   # 2-TC sharding on v7x
    )(idx, fused)


def _reference(user_fea, emb_gender, emb_age, emb_occupation, emb_area):
    return jnp.concatenate(
        [emb_gender[user_fea[:, 0]],
         emb_age[user_fea[:, 1]],
         emb_occupation[user_fea[:, 2]],
         emb_area[user_fea[:, 3]]], axis=1)


if __name__ == "__main__":
    # Small synthetic config (mirrors the module's __init__ fields).
    config = {
        "num_gender": 2,
        "num_age": 7,
        "num_occupation": 21,
        "num_zipcode": 50,
        "embedding_dim": 32,
    }
    B = 8

    key = jax.random.PRNGKey(0)
    k_g, k_a, k_o, k_z, k_f = jax.random.split(key, 5)

    # torch.nn.Embedding default init is N(0, 1); replicate deterministically.
    emb_gender = jax.random.normal(
        k_g, (config["num_gender"], config["embedding_dim"]), jnp.float32)
    emb_age = jax.random.normal(
        k_a, (config["num_age"], config["embedding_dim"]), jnp.float32)
    emb_occupation = jax.random.normal(
        k_o, (config["num_occupation"], config["embedding_dim"]), jnp.float32)
    emb_area = jax.random.normal(
        k_z, (config["num_zipcode"], config["embedding_dim"]), jnp.float32)

    # user_fea: (B, 4) int32 categorical features [gender, age, occupation, zipcode]
    maxes = jnp.array([config["num_gender"], config["num_age"],
                       config["num_occupation"], config["num_zipcode"]], jnp.int32)
    user_fea = (jax.random.randint(k_f, (B, 4), 0, 1 << 20, jnp.int32)
                % maxes).astype(jnp.int32)

    out = user_embedding_ml(user_fea, emb_gender, emb_age, emb_occupation, emb_area)
    out = jax.block_until_ready(out)

    ref = _reference(user_fea, emb_gender, emb_age, emb_occupation, emb_area)
    assert out.shape == (B, 4 * config["embedding_dim"]), out.shape
    assert out.dtype == jnp.float32, out.dtype
    assert jnp.allclose(out, ref, atol=1e-6), "mismatch vs reference"

    print("KERNEL_OK")
</pallas_src>

<mosaic_0001>
module attributes {stable_mosaic.version = 11 : i64} {
  func.func @_user_embedding_kernel(%arg0: i32, %arg1: memref<8x4xi32, #tpu.memory_space<vmem>>, %arg2: memref<128x128xf32, #tpu.memory_space<vmem>>, %arg3: memref<8x128xf32, #tpu.memory_space<vmem>>) attributes {dimension_semantics = [#tpu.dimension_semantics<parallel>], iteration_bounds = array<i64: 1>, scalar_prefetch = 0 : i64, scratch_operands = 0 : i64, tpu.core_type = #tpu.core_type<tc>, window_params = [{transform_indices = @transform_0, window_bounds = array<i64: 8, 4>}, {pipeline_mode = #tpu.pipeline_mode<synchronous>, transform_indices = @transform_1, window_bounds = array<i64: 128, 128>}, {transform_indices = @transform_2, window_bounds = array<i64: 8, 128>}]} {
    %c0 = arith.constant 0 : index
    %c0_0 = arith.constant 0 : index
    %0 = vector.load %arg1[%c0, %c0_0] : memref<8x4xi32, #tpu.memory_space<vmem>>, vector<8x4xi32>
    %c0_1 = arith.constant 0 : index
    %c0_2 = arith.constant 0 : index
    %1 = vector.load %arg2[%c0_1, %c0_2] : memref<128x128xf32, #tpu.memory_space<vmem>>, vector<128x128xf32>
    %2 = tpu.iota {dimensions = array<i32: 1>} : vector<8x128xi32>
    %3 = vector.extract_strided_slice %0 {offsets = [0, 0], sizes = [8, 1], strides = [1, 1]} : vector<8x4xi32> to vector<8x1xi32>
    %4 = vector.broadcast %3 : vector<8x1xi32> to vector<8x128xi32>
    %5 = arith.cmpi eq, %4, %2 : vector<8x128xi32>
    %6 = vector.extract_strided_slice %0 {offsets = [0, 1], sizes = [8, 1], strides = [1, 1]} : vector<8x4xi32> to vector<8x1xi32>
    %7 = vector.broadcast %6 : vector<8x1xi32> to vector<8x128xi32>
    %8 = arith.cmpi eq, %7, %2 : vector<8x128xi32>
    %9 = arith.ori %5, %8 : vector<8x128xi1>
    %10 = vector.extract_strided_slice %0 {offsets = [0, 2], sizes = [8, 1], strides = [1, 1]} : vector<8x4xi32> to vector<8x1xi32>
    %11 = vector.broadcast %10 : vector<8x1xi32> to vector<8x128xi32>
    %12 = arith.cmpi eq, %11, %2 : vector<8x128xi32>
    %13 = arith.ori %9, %12 : vector<8x128xi1>
    %14 = vector.extract_strided_slice %0 {offsets = [0, 3], sizes = [8, 1], strides = [1, 1]} : vector<8x4xi32> to vector<8x1xi32>
    %15 = vector.broadcast %14 : vector<8x1xi32> to vector<8x128xi32>
    %16 = arith.cmpi eq, %15, %2 : vector<8x128xi32>
    %17 = arith.ori %13, %16 : vector<8x128xi1>
    %18 = arith.extui %17 : vector<8x128xi1> to vector<8x128xi32>
    %19 = arith.sitofp %18 : vector<8x128xi32> to vector<8x128xf32>
    %cst = arith.constant dense<0.000000e+00> : vector<8x128xf32>
    %20 = tpu.matmul %19, %1, %cst {dimension_numbers = #tpu.dot_dimension_numbers<[1], [0], [0], [1], [0, 0, 1, 1], [], []>} : vector<8x128xf32>, vector<128x128xf32>, vector<8x128xf32> -> vector<8x128xf32>
    %c0_3 = arith.constant 0 : index
    %c0_4 = arith.constant 0 : index
    %21 = vector.load %arg3[%c0_3, %c0_4] : memref<8x128xf32, #tpu.memory_space<vmem>>, vector<8x128xf32>
    tpu.vector_store %arg3[%c0_3, %c0_4], %20 {strides = array<i32>} : memref<8x128xf32, #tpu.memory_space<vmem>>, vector<8x128xf32>,
    return
  }
  func.func @transform_0(%arg0: i32) -> (i32, i32) {
    %c0_i32 = arith.constant 0 : i32
    %c0_i32_0 = arith.constant 0 : i32
    return %arg0, %c0_i32 : i32, i32
  }
  func.func @transform_1(%arg0: i32) -> (i32, i32) {
    %c0_i32 = arith.constant 0 : i32
    %c0_i32_0 = arith.constant 0 : i32
    %c0_i32_1 = arith.constant 0 : i32
    return %c0_i32, %c0_i32_0 : i32, i32
  }
  func.func @transform_2(%arg0: i32) -> (i32, i32) {
    %c0_i32 = arith.constant 0 : i32
    %c0_i32_0 = arith.constant 0 : i32
    return %arg0, %c0_i32 : i32, i32
  }
}

</mosaic_0001>

<llo_original>
// kernel: user_embedding_ml.1
$region0: #{user_embedding_ml.1}
  #allocation0 [shape = 'u32[]', space=smem, size = 0x4, offset = 0x4, fixed_abs, tag = 'smem constant byte address 0x4 - core index']
  #allocation1 [shape = 'u32[72,128]{1,0:T(1,128)}', space=vmem, size = 0x9000, scoped, tag = 'internal scratch']
  %s0 = inlined_call_operand.vmem [shape: s32[8,4], index: 0, kind: input, shape index: {}]
  %s1 = inlined_call_operand.vmem [shape: f32[128,128], index: 1, kind: input, shape index: {}]
  %s2 = inlined_call_operand.hbm [shape: f32[8,128], index: 2, kind: output, shape index: {}]
  %s3 = sld [smem:[#allocation0]]
  $region18: #{user_embedding_ml.1} parent=0
    _
  %s5 = ssub.s32 1, %s3
  %s6 = scalar_select 0, %s5, %s3
  $region1: #{user_embedding_ml.1} parent=0
    #allocation2 [shape = 'u8[4096]{0}', space=vmem, size = 0x1000, scoped, tag = 'output window, operand 0, single buffered']
    #allocation3 [shape = 's32[1]{0}', space=sflag, size = 0x4, scoped, tag = 'scoped memory for user_embedding_ml.1']
    %7 = vsyncpa [#allocation3], 0
    // Predicated region
    $region2: #{user_embedding_ml.1} parent=1 // pred_check
      _
    $region3: #{user_embedding_ml.1} parent=1 // pred_check_branch
      %9 = sbr.rel (0) target = $region5
    $region4: #{user_embedding_ml.1} parent=1 // pred_region
      _
    $region5: #{user_embedding_ml.1} parent=1 // pred_fallthru
      _
    // Predicated region
    $region6: #{user_embedding_ml.1} parent=1 // pred_check
      _
    $region7: #{user_embedding_ml.1} parent=1 // pred_check_branch
      %11 = sbr.rel (0) target = $region9
    $region8: #{user_embedding_ml.1} parent=1 // pred_region
      _
    $region9: #{user_embedding_ml.1} parent=1 // pred_fallthru
      _
    %v12 = vld [vmem:[%s0] sm:$0xff]
    %v13 = vld [vmem:[%s1] sm:$0xff]
    %v14 = vld [vmem:[%s1 + $0x8] sm:$0xff]
    %v15 = vld [vmem:[%s1 + $0x10] sm:$0xff]
    %v16 = vld [vmem:[%s1 + $0x18] sm:$0xff]
    %v17 = vld [vmem:[%s1 + $0x20] sm:$0xff]
    %v18 = vld [vmem:[%s1 + $0x28] sm:$0xff]
    %v19 = vld [vmem:[%s1 + $0x30] sm:$0xff]
    %v20 = vld [vmem:[%s1 + $0x38] sm:$0xff]
    %v21 = vld [vmem:[%s1 + $0x40] sm:$0xff]
    %v22 = vld [vmem:[%s1 + $0x48] sm:$0xff]
    %v23 = vld [vmem:[%s1 + $0x50] sm:$0xff]
    %v24 = vld [vmem:[%s1 + $0x58] sm:$0xff]
    %v25 = vld [vmem:[%s1 + $0x60] sm:$0xff]
    %v26 = vld [vmem:[%s1 + $0x68] sm:$0xff]
    %v27 = vld [vmem:[%s1 + $0x70] sm:$0xff]
    %v28 = vld [vmem:[%s1 + $0x78] sm:$0xff]
    %v29 = vlaneseq
    %v30 = vand.u32 %v29, 127
    %31 = vset.pattern.permute.xlu0 0
    %32 = vperm.xlu0 %31, %v12
    %v33 = vpop.permute.xlu0 %32
    %vm34 = vcmp.eq.s32.totalorder %v33, %v30
    %35 = vset.pattern.permute.xlu0 1
    %36 = vperm.xlu0 %35, %v12
    %v37 = vpop.permute.xlu0 %36
    %vm38 = vcmp.eq.s32.totalorder %v37, %v30
    %vm39 = vmor %vm34, %vm38
    %40 = vset.pattern.permute.xlu0 2
    %41 = vperm.xlu0 %40, %v12
    %v42 = vpop.permute.xlu0 %41
    %vm43 = vcmp.eq.s32.totalorder %v42, %v30
    %vm44 = vmor %vm39, %vm43
    %45 = vset.pattern.permute.xlu0 3
    %46 = vperm.xlu0 %45, %v12
    %v47 = vpop.permute.xlu0 %46
    %vm48 = vcmp.eq.s32.totalorder %v47, %v30
    %vm49 = vmor %vm44, %vm48
    %v50 = vsel %vm49, 1, 0
    %v51 = vcvt.s32.f32 %v50
    %52 = vmatpush.msra.mxu0 %v28
    %53 = vmatpush.msra.mxu0 %v27
    %54 = vmatpush.msra.mxu0 %v26
    %55 = vmatpush.msra.mxu0 %v25
    %56 = vmatpush.msra.mxu0 %v24
    %57 = vmatpush.msra.mxu0 %v23
    %58 = vmatpush.msra.mxu0 %v22
    %59 = vmatpush.msra.mxu0 %v21
    %60 = vmatpush.msra.mxu0 %v20
    %61 = vmatpush.msra.mxu0 %v19
    %62 = vmatpush.msra.mxu0 %v18
    %63 = vmatpush.msra.mxu0 %v17
    %64 = vmatpush.msra.mxu0 %v16
    %65 = vmatpush.msra.mxu0 %v15
    %66 = vmatpush.msra.mxu0 %v14
    %67 = vmatpush.msra.mxu0 %v13
    %68 = vmatmul.f32.gmra.mxu0 %v51
    %v69 = vpop.f32.mrf.mxu0
    %v70 = vadd.f32 0.0, %v69
    %71 = vdwg.mxu0
    %72 = vst [vmem:[#allocation2] sm:$0xff] %v70
    // Predicated region
    $region10: #{user_embedding_ml.1} parent=1 // pred_check
      _
    $region11: #{user_embedding_ml.1} parent=1 // pred_check_branch
      %74 = sbr.rel (0) target = $region13
    $region12: #{user_embedding_ml.1} parent=1 // pred_region
      %76 = vsyncadd [#allocation3], 0
      %s78 = sshll.u32 [#allocation2], 4
      %s79 = int_to_ptr.vmem [resolvable:$true] %s78
      %s80 = sshll.u32 %s2, 4
      %s81 = int_to_ptr.hbm [resolvable:$true] %s80
      %83 = dma.vmem_to_hbm [thread:$0]  %s79, 128, %s81, [#allocation3]
    $region13: #{user_embedding_ml.1} parent=1 // pred_fallthru
      _
    // Predicated region
    $region14: #{user_embedding_ml.1} parent=1 // pred_check
      _
    $region15: #{user_embedding_ml.1} parent=1 // pred_check_branch
      %85 = sbr.rel (0) target = $region17
    $region16: #{user_embedding_ml.1} parent=1 // pred_region
      %87 = dma.done [#allocation3], 128
    $region17: #{user_embedding_ml.1} parent=1 // pred_fallthru
      _
    %88 = vsyncpa [#allocation3], 1

</llo_original>
